<compile_context>
chip_gen: v7x
topology: tpu7x:2x2x1
jax: 0.10.0
libtpu: 0.0.40
codegen_flags: <defaults>
</compile_context>

<pallas_src>
import functools

import jax
import jax.numpy as jnp
from jax.experimental import pallas as pl
from jax.experimental.pallas import tpu as pltpu

IN_F = 16      # fc1 in_features
HID_F = 8      # fc1 out_features / fc2 in_features
OUT_F = 4      # fc2 out_features


def mlp_kernel(x_ref, w1_ref, w2_ref, b1_ref, b2_ref, o_ref):
    # x:  (tb, 16)  activation-transfer dtype (bf16 default)
    # w1: (16, 8)   transfer dtype        b1: (1, 8)  f32
    # w2: (8, 4)    transfer dtype        b2: (1, 4)  f32
    x = x_ref[...]
    # fc1: MXU matmul with f32 accumulation; bias + ReLU on the VPU in f32.
    h = jnp.dot(x, w1_ref[...], preferred_element_type=jnp.float32)
    h = jnp.maximum(h + b1_ref[...], 0.0)
    # fc2 straight into the narrow (tb, 4) output block.
    y = jnp.dot(h.astype(w2_ref.dtype), w2_ref[...],
                preferred_element_type=jnp.float32)
    o_ref[...] = (y + b2_ref[...]).astype(o_ref.dtype)


@functools.partial(jax.jit, static_argnames=("tile_b", "activation_dtype"))
def mlp_forward(x, w1, b1, w2, b2, *, tile_b=8192, activation_dtype=jnp.bfloat16):
    """x: (B, ...) with prod(...) == 16. PyTorch-style params:
       w1: (8, 16), b1: (8,), w2: (4, 8), b2: (4,). Returns (B, 4) float32."""
    B = x.shape[0]
    x2d = x.reshape(B, -1)                       # nn.Flatten(start_dim=1)
    assert x2d.shape[1] == IN_F, "MLPNet expects 16 flattened features"

    cd = jnp.dtype(activation_dtype)             # HBM transfer / MXU input dtype
    x2d = x2d.astype(cd)

    # Tiny resident parameter blocks: weights in the transfer dtype, biases in f32.
    w1t = w1.T.astype(cd)                        # (16, 8)
    w2t = w2.T.astype(cd)                        # (8, 4)
    b1r = b1.reshape(1, HID_F).astype(jnp.float32)
    b2r = b2.reshape(1, OUT_F).astype(jnp.float32)

    # Batch tile: multiple of 32 (bf16 sublane-packing friendly), clamped for small B.
    tb = ((min(int(tile_b), B) + 31) // 32) * 32
    tb = max(32, tb)
    nb = pl.cdiv(B, tb)
    b_pad = nb * tb
    if b_pad != B:
        x2d = jnp.pad(x2d, ((0, b_pad - B), (0, 0)))   # zero-pad tail tile

    bytes_in = jnp.dtype(cd).itemsize
    cost = pl.CostEstimate(
        flops=b_pad * (2 * IN_F * HID_F + 2 * HID_F * OUT_F + HID_F),
        transcendentals=0,
        bytes_accessed=(b_pad * IN_F * bytes_in            # x read
                        + (w1t.size + w2t.size) * bytes_in  # weights
                        + (b1r.size + b2r.size) * 4         # biases (f32)
                        + b_pad * OUT_F * 4),                # narrow f32 output write
    )

    out_pad = pl.pallas_call(
        mlp_kernel,
        out_shape=jax.ShapeDtypeStruct((b_pad, OUT_F), jnp.float32),
        grid=(nb,),
        in_specs=[
            pl.BlockSpec((tb, IN_F), lambda i: (i, 0)),        # x: tiled over batch
            pl.BlockSpec((IN_F, HID_F), lambda i: (0, 0)),     # params stay resident
            pl.BlockSpec((HID_F, OUT_F), lambda i: (0, 0)),
            pl.BlockSpec((1, HID_F), lambda i: (0, 0)),
            pl.BlockSpec((1, OUT_F), lambda i: (0, 0)),
        ],
        out_specs=pl.BlockSpec((tb, OUT_F), lambda i: (i, 0)),
        compiler_params=pltpu.CompilerParams(
            dimension_semantics=("parallel",),   # v7x: shard batch grid across both TCs
        ),
        cost_estimate=cost,
    )(x2d, w1t, w2t, b1r, b2r)

    return out_pad[:B]                            # drop batch padding only


def reference_forward(x, w1, b1, w2, b2):
    x2d = x.reshape(x.shape[0], -1).astype(jnp.float32)
    h = jnp.maximum(x2d @ w1.T + b1, 0.0)
    return h @ w2.T + b2


if __name__ == "__main__":
    key = jax.random.PRNGKey(0)
    kx, k1, k2, k3, k4, kx2 = jax.random.split(key, 6)

    # Deterministic parameters (PyTorch nn.Linear shapes).
    w1 = jax.random.normal(k1, (8, 16), dtype=jnp.float32) * 0.1
    b1 = jax.random.normal(k2, (8,), dtype=jnp.float32) * 0.1
    w2 = jax.random.normal(k3, (4, 8), dtype=jnp.float32) * 0.1
    b2 = jax.random.normal(k4, (4,), dtype=jnp.float32) * 0.1

    # 1) Small batch, default bf16 transfer path (Flatten: (8,4,4) -> (8,16)).
    x = jax.random.normal(kx, (8, 4, 4), dtype=jnp.float32)
    ref = reference_forward(x, w1, b1, w2, b2)
    out = mlp_forward(x, w1, b1, w2, b2)
    jax.block_until_ready(out)
    assert out.shape == (8, 4)
    assert jnp.allclose(out, ref, atol=3e-2, rtol=3e-2)

    # 2) Exact f32 transfer path, tight tolerance.
    out_f32 = mlp_forward(x, w1, b1, w2, b2, activation_dtype=jnp.float32)
    jax.block_until_ready(out_f32)
    assert jnp.allclose(out_f32, ref, atol=1e-5, rtol=1e-5)

    # 3) Multi-tile grid + padded tail: B=100 with tile_b=32 -> 4 grid steps.
    x2 = jax.random.normal(kx2, (100, 2, 8), dtype=jnp.float32)
    ref2 = reference_forward(x2, w1, b1, w2, b2)
    out2 = mlp_forward(x2, w1, b1, w2, b2, tile_b=32)
    jax.block_until_ready(out2)
    assert out2.shape == (100, 4)
    assert jnp.allclose(out2, ref2, atol=3e-2, rtol=3e-2)

    out2_f32 = mlp_forward(x2, w1, b1, w2, b2, tile_b=32, activation_dtype=jnp.float32)
    jax.block_until_ready(out2_f32)
    assert jnp.allclose(out2_f32, ref2, atol=1e-5, rtol=1e-5)

    print("KERNEL_OK")
</pallas_src>

<mosaic_0001>
module attributes {stable_mosaic.version = 11 : i64} {
  func.func @mlp_kernel(%arg0: i32, %arg1: memref<32x16xbf16, #tpu.memory_space<vmem>>, %arg2: memref<16x8xbf16, #tpu.memory_space<vmem>>, %arg3: memref<8x4xbf16, #tpu.memory_space<vmem>>, %arg4: memref<1x8xf32, #tpu.memory_space<vmem>>, %arg5: memref<1x4xf32, #tpu.memory_space<vmem>>, %arg6: memref<32x4xf32, #tpu.memory_space<vmem>>) attributes {dimension_semantics = [#tpu.dimension_semantics<parallel>], iteration_bounds = array<i64: 1>, scalar_prefetch = 0 : i64, scratch_operands = 0 : i64, tpu.core_type = #tpu.core_type<tc>, window_params = [{transform_indices = @transform_0, window_bounds = array<i64: 32, 16>}, {pipeline_mode = #tpu.pipeline_mode<synchronous>, transform_indices = @transform_1, window_bounds = array<i64: 16, 8>}, {pipeline_mode = #tpu.pipeline_mode<synchronous>, transform_indices = @transform_2, window_bounds = array<i64: 8, 4>}, {pipeline_mode = #tpu.pipeline_mode<synchronous>, transform_indices = @transform_3, window_bounds = array<i64: 1, 8>}, {pipeline_mode = #tpu.pipeline_mode<synchronous>, transform_indices = @transform_4, window_bounds = array<i64: 1, 4>}, {transform_indices = @transform_5, window_bounds = array<i64: 32, 4>}]} {
    %c0 = arith.constant 0 : index
    %c0_0 = arith.constant 0 : index
    %0 = vector.load %arg1[%c0, %c0_0] : memref<32x16xbf16, #tpu.memory_space<vmem>>, vector<32x16xbf16>
    %c0_1 = arith.constant 0 : index
    %c0_2 = arith.constant 0 : index
    %1 = vector.load %arg2[%c0_1, %c0_2] : memref<16x8xbf16, #tpu.memory_space<vmem>>, vector<16x8xbf16>
    %cst = arith.constant dense<0.000000e+00> : vector<32x8xf32>
    %2 = tpu.matmul %0, %1, %cst {dimension_numbers = #tpu.dot_dimension_numbers<[1], [0], [0], [1], [0, 0, 1, 1], [], []>} : vector<32x16xbf16>, vector<16x8xbf16>, vector<32x8xf32> -> vector<32x8xf32>
    %c0_3 = arith.constant 0 : index
    %c0_4 = arith.constant 0 : index
    %3 = vector.load %arg4[%c0_3, %c0_4] : memref<1x8xf32, #tpu.memory_space<vmem>>, vector<1x8xf32>
    %4 = vector.broadcast %3 : vector<1x8xf32> to vector<32x8xf32>
    %5 = arith.addf %2, %4 : vector<32x8xf32>
    %cst_5 = arith.constant 0.000000e+00 : f32
    %6 = vector.broadcast %cst_5 : f32 to vector<32x8xf32>
    %7 = arith.maximumf %5, %6 : vector<32x8xf32>
    %8 = arith.truncf %7 : vector<32x8xf32> to vector<32x8xbf16>
    %c0_6 = arith.constant 0 : index
    %c0_7 = arith.constant 0 : index
    %9 = vector.load %arg3[%c0_6, %c0_7] : memref<8x4xbf16, #tpu.memory_space<vmem>>, vector<8x4xbf16>
    %cst_8 = arith.constant dense<0.000000e+00> : vector<32x4xf32>
    %10 = tpu.matmul %8, %9, %cst_8 {dimension_numbers = #tpu.dot_dimension_numbers<[1], [0], [0], [1], [0, 0, 1, 1], [], []>} : vector<32x8xbf16>, vector<8x4xbf16>, vector<32x4xf32> -> vector<32x4xf32>
    %c0_9 = arith.constant 0 : index
    %c0_10 = arith.constant 0 : index
    %11 = vector.load %arg5[%c0_9, %c0_10] : memref<1x4xf32, #tpu.memory_space<vmem>>, vector<1x4xf32>
    %12 = vector.broadcast %11 : vector<1x4xf32> to vector<32x4xf32>
    %13 = arith.addf %10, %12 : vector<32x4xf32>
    %c0_11 = arith.constant 0 : index
    %c0_12 = arith.constant 0 : index
    %14 = vector.load %arg6[%c0_11, %c0_12] : memref<32x4xf32, #tpu.memory_space<vmem>>, vector<32x4xf32>
    tpu.vector_store %arg6[%c0_11, %c0_12], %13 {strides = array<i32>} : memref<32x4xf32, #tpu.memory_space<vmem>>, vector<32x4xf32>,
    return
  }
  func.func @transform_0(%arg0: i32) -> (i32, i32) {
    %c0_i32 = arith.constant 0 : i32
    %c0_i32_0 = arith.constant 0 : i32
    return %arg0, %c0_i32 : i32, i32
  }
  func.func @transform_1(%arg0: i32) -> (i32, i32) {
    %c0_i32 = arith.constant 0 : i32
    %c0_i32_0 = arith.constant 0 : i32
    %c0_i32_1 = arith.constant 0 : i32
    return %c0_i32, %c0_i32_0 : i32, i32
  }
  func.func @transform_2(%arg0: i32) -> (i32, i32) {
    %c0_i32 = arith.constant 0 : i32
    %c0_i32_0 = arith.constant 0 : i32
    %c0_i32_1 = arith.constant 0 : i32
    return %c0_i32, %c0_i32_0 : i32, i32
  }
  func.func @transform_3(%arg0: i32) -> (i32, i32) {
    %c0_i32 = arith.constant 0 : i32
    %c0_i32_0 = arith.constant 0 : i32
    %c0_i32_1 = arith.constant 0 : i32
    return %c0_i32, %c0_i32_0 : i32, i32
  }
  func.func @transform_4(%arg0: i32) -> (i32, i32) {
    %c0_i32 = arith.constant 0 : i32
    %c0_i32_0 = arith.constant 0 : i32
    %c0_i32_1 = arith.constant 0 : i32
    return %c0_i32, %c0_i32_0 : i32, i32
  }
  func.func @transform_5(%arg0: i32) -> (i32, i32) {
    %c0_i32 = arith.constant 0 : i32
    %c0_i32_0 = arith.constant 0 : i32
    return %arg0, %c0_i32 : i32, i32
  }
}

</mosaic_0001>

<llo_original>
// kernel: mlp_forward.1
$region0: #{mlp_forward.1}
  #allocation0 [shape = 'u32[]', space=smem, size = 0x4, offset = 0x4, fixed_abs, tag = 'smem constant byte address 0x4 - core index']
  #allocation1 [shape = 'u32[144,128]{1,0:T(1,128)}', space=vmem, size = 0x12000, scoped, tag = 'internal scratch']
  %s0 = inlined_call_operand.vmem [shape: bf16[32,16], index: 0, kind: input, shape index: {}]
  %s1 = inlined_call_operand.vmem [shape: bf16[16,8], index: 1, kind: input, shape index: {}]
  %s2 = inlined_call_operand.vmem [shape: bf16[8,4], index: 2, kind: input, shape index: {}]
  %s3 = inlined_call_operand.vmem [shape: f32[1,8], index: 3, kind: input, shape index: {}]
  %s4 = inlined_call_operand.vmem [shape: f32[1,4], index: 4, kind: input, shape index: {}]
  %s5 = inlined_call_operand.vmem [shape: f32[32,4], index: 5, kind: output, shape index: {}]
  %s6 = sld [smem:[#allocation0]]
  $region30: #{mlp_forward.1} parent=0
    _
  %s8 = ssub.s32 1, %s6
  %s9 = scalar_select 0, %s8, %s6
  // Predicated region
  $region2: #{mlp_forward.1} parent=0 // pred_check
    _
  $region3: #{mlp_forward.1} parent=0 // pred_check_branch
    %11 = sbr.rel (0) target = $region5
  $region4: #{mlp_forward.1} parent=0 // pred_region
    _
  $region5: #{mlp_forward.1} parent=0 // pred_fallthru
    _
  // Predicated region
  $region6: #{mlp_forward.1} parent=0 // pred_check
    _
  $region7: #{mlp_forward.1} parent=0 // pred_check_branch
    %13 = sbr.rel (0) target = $region9
  $region8: #{mlp_forward.1} parent=0 // pred_region
    _
  $region9: #{mlp_forward.1} parent=0 // pred_fallthru
    _
  // Predicated region
  $region10: #{mlp_forward.1} parent=0 // pred_check
    _
  $region11: #{mlp_forward.1} parent=0 // pred_check_branch
    %15 = sbr.rel (0) target = $region13
  $region12: #{mlp_forward.1} parent=0 // pred_region
    _
  $region13: #{mlp_forward.1} parent=0 // pred_fallthru
    _
  // Predicated region
  $region14: #{mlp_forward.1} parent=0 // pred_check
    _
  $region15: #{mlp_forward.1} parent=0 // pred_check_branch
    %17 = sbr.rel (0) target = $region17
  $region16: #{mlp_forward.1} parent=0 // pred_region
    _
  $region17: #{mlp_forward.1} parent=0 // pred_fallthru
    _
  // Predicated region
  $region18: #{mlp_forward.1} parent=0 // pred_check
    _
  $region19: #{mlp_forward.1} parent=0 // pred_check_branch
    %19 = sbr.rel (0) target = $region21
  $region20: #{mlp_forward.1} parent=0 // pred_region
    _
  $region21: #{mlp_forward.1} parent=0 // pred_fallthru
    _
  %v21 = vld [vmem:[%s0] sm:$0xf]
  %v22 = vld [vmem:[%s0 + $0x4] sm:$0xf]
  %v23 = vld [vmem:[%s0 + $0x8] sm:$0xf]
  %v24 = vld [vmem:[%s0 + $0xc] sm:$0xf]
  %v25 = vld [vmem:[%s1] sm:$0xf]
  %v26 = vld [vmem:[%s1 + $0x4] sm:$0xf]
  %v27 = vld [vmem:[%s3] sm:$0x1]
  %v29 = vlaneseq
  %v30 = vshrl.u32 %v29, 7
  %v31 = vsub.s32 0, %v30
  %v32 = vrot.slane %v27, %v31
  %v38 = vunpack.c.l.b16 %v21
  %v39 = vunpack.c.l.b16 %v22
  %v40 = vunpack.c.l.b16 %v23
  %v41 = vunpack.c.l.b16 %v24
  %v42 = vpack.c.b16 %v39, %v38
  %v43 = vpack.c.b16 %v41, %v40
  %v46 = vunpack.c.l.b16 %v25
  %v47 = vunpack.c.l.b16 %v26
  %v48 = vpack.c.b16 %v47, %v46
  %vm50 = vcmask 130048
  %v52 = vsel %vm50, %v42, 0
  %v55 = vsel %vm50, %v43, 0
  %57 = vmatprep.subr.bf16.mxu0 0
  %58 = vmatpush1.bf16.msra.mxu0 %v48
  %59 = vmatprep.subr.bf16.mxu0 0
  %60 = vmatpush1.bf16.msra.mxu0 0
  %61 = vmatprep.subr.bf16.mxu0 0
  %62 = vmatpush1.bf16.msra.mxu0 0
  %63 = vmatprep.subr.bf16.mxu0 0
  %64 = vmatpush1.bf16.msra.mxu0 0
  %65 = vmatprep.subr.bf16.mxu0 0
  %66 = vmatpush1.bf16.msra.mxu0 0
  %67 = vmatprep.subr.bf16.mxu0 0
  %68 = vmatpush1.bf16.msra.mxu0 0
  %69 = vmatprep.subr.bf16.mxu0 0
  %70 = vmatpush1.bf16.msra.mxu0 0
  %71 = vmatprep.subr.bf16.mxu0 0
  %72 = vmatpush1.bf16.msra.mxu0 0
  %73 = vmatprep.subr.bf16.mxu0 0
  %74 = vmatpush1.bf16.msra.mxu0 0
  %75 = vmatprep.subr.bf16.mxu0 0
  %76 = vmatpush1.bf16.msra.mxu0 0
  %77 = vmatprep.subr.bf16.mxu0 0
  %78 = vmatpush1.bf16.msra.mxu0 0
  %79 = vmatprep.subr.bf16.mxu0 0
  %80 = vmatpush1.bf16.msra.mxu0 0
  %81 = vmatprep.subr.bf16.mxu0 0
  %82 = vmatpush1.bf16.msra.mxu0 0
  %83 = vmatprep.subr.bf16.mxu0 0
  %84 = vmatpush1.bf16.msra.mxu0 0
  %85 = vmatprep.subr.bf16.mxu0 0
  %86 = vmatpush1.bf16.msra.mxu0 0
  %87 = vmatprep.subr.bf16.mxu0 0
  %88 = vmatpush1.bf16.msra.mxu0 0
  %89 = vmatprep.mubr.bf16.mxu0 0
  %90 = vmatmul.mubr.bf16.gmra.mrb[0].mxu0 %v52
  %v91 = vpop.f32.mrb[0].mxu0
  %v92 = vadd.f32 %v32, %v91
  %v93 = vpop.f32.mrb[0].mxu0
  %v94 = vpop.f32.mrb[0].mxu0
  %v95 = vadd.f32 %v32, %v94
  %v96 = vpop.f32.mrb[0].mxu0
  %97 = vmatprep.mubr.bf16.mxu0 0
  %98 = vmatmul.mubr.bf16.gmra.mrb[0].mxu0 %v55
  %v99 = vpop.f32.mrb[0].mxu0
  %v100 = vadd.f32 %v32, %v99
  %v101 = vpop.f32.mrb[0].mxu0
  %v102 = vpop.f32.mrb[0].mxu0
  %v103 = vadd.f32 %v32, %v102
  %v104 = vpop.f32.mrb[0].mxu0
  %105 = vdwg.mxu0
  %v106 = vmax.f32 %v92, 0.0
  %v107 = vmax.f32 %v95, 0.0
  %v108 = vmax.f32 %v100, 0.0
  %v109 = vmax.f32 %v103, 0.0
  %v110 = vpack.c.bf16 %v107, %v106
  %v111 = vpack.c.bf16 %v109, %v108
  %v112 = vld [vmem:[%s2] sm:$0xf]
  %v113 = vld [vmem:[%s4] sm:$0x1]
  %v115 = vlaneseq
  %v116 = vshrl.u32 %v115, 7
  %v117 = vsub.s32 0, %v116
  %v118 = vrot.slane %v113, %v117
  %vm120 = vcmask 64512
  %v122 = vsel %vm120, %v110, 0
  %v125 = vsel %vm120, %v111, 0
  %vm127 = vcmask 1043456
  %v129 = vsel %vm127, %v112, 0
  %131 = vmatprep.subr.bf16.mxu0 0
  %132 = vmatpush1.bf16.msra.mxu0 %v129
  %133 = vmatprep.subr.bf16.mxu0 0
  %134 = vmatpush1.bf16.msra.mxu0 0
  %135 = vmatprep.subr.bf16.mxu0 0
  %136 = vmatpush1.bf16.msra.mxu0 0
  %137 = vmatprep.subr.bf16.mxu0 0
  %138 = vmatpush1.bf16.msra.mxu0 0
  %139 = vmatprep.subr.bf16.mxu0 0
  %140 = vmatpush1.bf16.msra.mxu0 0
  %141 = vmatprep.subr.bf16.mxu0 0
  %142 = vmatpush1.bf16.msra.mxu0 0
  %143 = vmatprep.subr.bf16.mxu0 0
  %144 = vmatpush1.bf16.msra.mxu0 0
  %145 = vmatprep.subr.bf16.mxu0 0
  %146 = vmatpush1.bf16.msra.mxu0 0
  %147 = vmatprep.subr.bf16.mxu0 0
  %148 = vmatpush1.bf16.msra.mxu0 0
  %149 = vmatprep.subr.bf16.mxu0 0
  %150 = vmatpush1.bf16.msra.mxu0 0
  %151 = vmatprep.subr.bf16.mxu0 0
  %152 = vmatpush1.bf16.msra.mxu0 0
  %153 = vmatprep.subr.bf16.mxu0 0
  %154 = vmatpush1.bf16.msra.mxu0 0
  %155 = vmatprep.subr.bf16.mxu0 0
  %156 = vmatpush1.bf16.msra.mxu0 0
  %157 = vmatprep.subr.bf16.mxu0 0
  %158 = vmatpush1.bf16.msra.mxu0 0
  %159 = vmatprep.subr.bf16.mxu0 0
  %160 = vmatpush1.bf16.msra.mxu0 0
  %161 = vmatprep.subr.bf16.mxu0 0
  %162 = vmatpush1.bf16.msra.mxu0 0
  %163 = vmatprep.mubr.bf16.mxu0 0
  %164 = vmatmul.mubr.bf16.gmra.mrb[0].mxu0 %v122
  %v165 = vpop.f32.mrb[0].mxu0
  %v166 = vadd.f32 %v118, %v165
  %v167 = vpop.f32.mrb[0].mxu0
  %v168 = vpop.f32.mrb[0].mxu0
  %v169 = vadd.f32 %v118, %v168
  %v170 = vpop.f32.mrb[0].mxu0
  %171 = vmatprep.mubr.bf16.mxu0 0
  %172 = vmatmul.mubr.bf16.gmra.mrb[0].mxu0 %v125
  %v173 = vpop.f32.mrb[0].mxu0
  %v174 = vadd.f32 %v118, %v173
  %v175 = vpop.f32.mrb[0].mxu0
  %v176 = vpop.f32.mrb[0].mxu0
  %v177 = vadd.f32 %v118, %v176
  %v178 = vpop.f32.mrb[0].mxu0
  %179 = vdwg.mxu0
  %vm180 = vcmask 31744
  %181 = vst.msk [vmem:[%s5] sm:$0xff] %vm180, %v166
  %182 = vst.msk [vmem:[%s5 + $0x8] sm:$0xff] %vm180, %v169
  %183 = vst.msk [vmem:[%s5 + $0x10] sm:$0xff] %vm180, %v174
  %184 = vst.msk [vmem:[%s5 + $0x18] sm:$0xff] %vm180, %v177
  // Predicated region
  $region22: #{mlp_forward.1} parent=0 // pred_check
    _
  $region23: #{mlp_forward.1} parent=0 // pred_check_branch
    %186 = sbr.rel (0) target = $region25
  $region24: #{mlp_forward.1} parent=0 // pred_region
    _
  $region25: #{mlp_forward.1} parent=0 // pred_fallthru
    _
  // Predicated region
  $region26: #{mlp_forward.1} parent=0 // pred_check
    _
  $region27: #{mlp_forward.1} parent=0 // pred_check_branch
    %188 = sbr.rel (0) target = $region29
  $region28: #{mlp_forward.1} parent=0 // pred_region
    _
  $region29: #{mlp_forward.1} parent=0 // pred_fallthru
    _

</llo_original>
